<compile_context>
chip_gen: v5e
topology: v5e:2x2
jax: 0.10.0
libtpu: 0.0.40
codegen_flags: <defaults>
</compile_context>

<pallas_src>
import functools

import jax
import jax.numpy as jnp
from jax import lax
from jax.experimental import pallas as pl
from jax.experimental.pallas import tpu as pltpu


def _proxy_anchor_kernel(x_ref, pT_ref, lbl_ref, o_ref,
                         pos_acc, neg_acc, cnt_acc, *, alpha, mrg):
    i = pl.program_id(0)
    C = pT_ref.shape[1]

    @pl.when(i == 0)
    def _init():
        pos_acc[...] = jnp.zeros_like(pos_acc)
        neg_acc[...] = jnp.zeros_like(neg_acc)
        cnt_acc[...] = jnp.zeros_like(cnt_acc)

    X = x_ref[...].astype(jnp.float32)                              # (TN, E)
    # F.normalize(X, p=2, dim=-1) with torch's 1e-12 clamp
    x_norm = jnp.sqrt(jnp.sum(X * X, axis=-1, keepdims=True))
    Xn = X / jnp.maximum(x_norm, 1e-12)

    # cos = Xn @ Pn.T ; proxies arrive pre-normalized & pre-transposed (E, C)
    cos = lax.dot_general(
        Xn, pT_ref[...],
        dimension_numbers=(((1,), (0,)), ((), ())),
        preferred_element_type=jnp.float32,
    )                                                               # (TN, C)

    lbl = lbl_ref[...]                                              # (TN, 1) int32
    classes = lax.broadcasted_iota(jnp.int32, cos.shape, 1)         # (TN, C)
    mask = lbl == classes                                           # one-hot positives

    pos_exp = jnp.exp(-alpha * (cos - mrg))
    neg_exp = jnp.exp(alpha * (cos + mrg))

    pos_acc[...] += jnp.sum(jnp.where(mask, pos_exp, 0.0), axis=0, keepdims=True)
    neg_acc[...] += jnp.sum(jnp.where(mask, 0.0, neg_exp), axis=0, keepdims=True)
    cnt_acc[...] += jnp.sum(mask.astype(jnp.float32), axis=0, keepdims=True)

    @pl.when(i == pl.num_programs(0) - 1)
    def _finalize():
        num_valid = jnp.sum((cnt_acc[...] > 0.0).astype(jnp.float32))
        pos_term = jnp.sum(jnp.log(1.0 + pos_acc[...])) / num_valid
        neg_term = jnp.sum(jnp.log(1.0 + neg_acc[...])) / jnp.float32(C)
        o_ref[0] = pos_term + neg_term


def proxy_anchor_loss(X, proxies, labels, nb_classes, mrg=0.1, alpha=32,
                      tile_n=None):
    """X: (N, E) f32, proxies: (C, E) f32, labels: (N,) int32 class ids."""
    N, E = X.shape
    C, E2 = proxies.shape
    assert C == nb_classes and E2 == E

    if tile_n is None:
        tile_n = N if N <= 128 else 128
    assert N % tile_n == 0 and (tile_n % 8 == 0 or tile_n == N)

    # One-time prologue (perf review): normalize proxies once, lay out (E, C)
    # so every grid step feeds the MXU directly.
    p_norm = jnp.sqrt(jnp.sum(proxies * proxies, axis=-1, keepdims=True))
    PnT = (proxies / jnp.maximum(p_norm, 1e-12)).T                  # (E, C)

    labels2d = labels.astype(jnp.int32).reshape(N, 1)               # (N, 1)

    kernel = functools.partial(_proxy_anchor_kernel,
                               alpha=float(alpha), mrg=float(mrg))
    out = pl.pallas_call(
        kernel,
        out_shape=jax.ShapeDtypeStruct((1,), jnp.float32),
        grid_spec=pltpu.PrefetchScalarGridSpec(
            num_scalar_prefetch=0,
            grid=(N // tile_n,),
            in_specs=[
                pl.BlockSpec((tile_n, E), lambda i: (i, 0)),        # X tile
                pl.BlockSpec((E, C), lambda i: (0, 0)),             # proxies (resident)
                pl.BlockSpec((tile_n, 1), lambda i: (i, 0)),        # labels tile
            ],
            out_specs=pl.BlockSpec(memory_space=pltpu.MemorySpace.SMEM),
            scratch_shapes=[
                pltpu.VMEM((1, C), jnp.float32),                    # pos per-class sum
                pltpu.VMEM((1, C), jnp.float32),                    # neg per-class sum
                pltpu.VMEM((1, C), jnp.float32),                    # positives count
            ],
        ),
        compiler_params=pltpu.CompilerParams(
            dimension_semantics=("arbitrary",)),                    # running accumulators
    )(X, PnT, labels2d)
    return out[0]


def proxy_anchor_ref(X, proxies, labels, nb_classes, mrg, alpha):
    """Pure-JAX reference mirroring the PyTorch module."""
    eps = 1e-12
    Pn = proxies / jnp.maximum(
        jnp.linalg.norm(proxies, axis=-1, keepdims=True), eps)
    Xn = X / jnp.maximum(jnp.linalg.norm(X, axis=-1, keepdims=True), eps)
    cos = Xn @ Pn.T
    P_one_hot = jax.nn.one_hot(labels, nb_classes, dtype=jnp.float32)
    pos_exp = jnp.exp(-alpha * (cos - mrg))
    neg_exp = jnp.exp(alpha * (cos + mrg))
    num_valid = jnp.sum((jnp.sum(P_one_hot, axis=0) != 0).astype(jnp.float32))
    P_sim_sum = jnp.sum(jnp.where(P_one_hot == 1, pos_exp, 0.0), axis=0)
    N_sim_sum = jnp.sum(jnp.where(P_one_hot == 1, 0.0, neg_exp), axis=0)
    pos_term = jnp.sum(jnp.log(1.0 + P_sim_sum)) / num_valid
    neg_term = jnp.sum(jnp.log(1.0 + N_sim_sum)) / nb_classes
    return pos_term + neg_term


if __name__ == "__main__":
    nb_classes = 16
    sz_embed = 32
    mrg = 0.1
    alpha = 32
    N = 16

    key = jax.random.PRNGKey(0)
    k_proxy, k_x, k_t = jax.random.split(key, 3)

    # deterministic parameter init (stand-in for kaiming_normal_)
    proxies = jax.random.normal(k_proxy, (nb_classes, sz_embed), jnp.float32)
    X = jax.random.normal(k_x, (N, sz_embed), jnp.float32)
    labels = jax.random.randint(k_t, (N,), 0, nb_classes, jnp.int32)

    loss = proxy_anchor_loss(X, proxies, labels, nb_classes,
                             mrg=mrg, alpha=alpha, tile_n=8)   # grid of 2 N-tiles
    loss = jax.block_until_ready(loss)

    ref = proxy_anchor_ref(X, proxies, labels, nb_classes, mrg, alpha)
    assert jnp.allclose(loss, ref, rtol=5e-4, atol=5e-4), (loss, ref)

    print("KERNEL_OK")
</pallas_src>

<mosaic_0001>
module attributes {stable_mosaic.version = 11 : i64} {
  func.func @_proxy_anchor_kernel(%arg0: i32, %arg1: memref<8x32xf32, #tpu.memory_space<vmem>>, %arg2: memref<32x16xf32, #tpu.memory_space<vmem>>, %arg3: memref<8x1xi32, #tpu.memory_space<vmem>>, %arg4: memref<1xf32, #tpu.memory_space<smem>>, %arg5: memref<1x16xf32, #tpu.memory_space<vmem>>, %arg6: memref<1x16xf32, #tpu.memory_space<vmem>>, %arg7: memref<1x16xf32, #tpu.memory_space<vmem>>) attributes {dimension_semantics = [#tpu.dimension_semantics<arbitrary>], iteration_bounds = array<i64: 2>, scalar_prefetch = 0 : i64, scratch_operands = 3 : i64, tpu.core_type = #tpu.core_type<tc>, window_params = [{transform_indices = @transform_0, window_bounds = array<i64: 8, 32>}, {pipeline_mode = #tpu.pipeline_mode<synchronous>, transform_indices = @transform_1, window_bounds = array<i64: 32, 16>}, {transform_indices = @transform_2, window_bounds = array<i64: 8, 1>}, {transform_indices = @transform_3, window_bounds = array<i64: 1>}]} {
    %c0_i32 = arith.constant 0 : i32
    %0 = arith.cmpi eq, %arg0, %c0_i32 : i32
    %1 = arith.extui %0 : i1 to i32
    %c0_i32_0 = arith.constant 0 : i32
    %2 = arith.cmpi ne, %1, %c0_i32_0 : i32
    scf.if %2 {
      %cst_30 = arith.constant 0.000000e+00 : f32
      %52 = vector.broadcast %cst_30 : f32 to vector<1x16xf32>
      %c0_31 = arith.constant 0 : index
      %c0_32 = arith.constant 0 : index
      %53 = vector.load %arg5[%c0_31, %c0_32] : memref<1x16xf32, #tpu.memory_space<vmem>>, vector<1x16xf32>
      tpu.vector_store %arg5[%c0_31, %c0_32], %52 {strides = array<i32>} : memref<1x16xf32, #tpu.memory_space<vmem>>, vector<1x16xf32>,
      %cst_33 = arith.constant 0.000000e+00 : f32
      %54 = vector.broadcast %cst_33 : f32 to vector<1x16xf32>
      %c0_34 = arith.constant 0 : index
      %c0_35 = arith.constant 0 : index
      %55 = vector.load %arg6[%c0_34, %c0_35] : memref<1x16xf32, #tpu.memory_space<vmem>>, vector<1x16xf32>
      tpu.vector_store %arg6[%c0_34, %c0_35], %54 {strides = array<i32>} : memref<1x16xf32, #tpu.memory_space<vmem>>, vector<1x16xf32>,
      %cst_36 = arith.constant 0.000000e+00 : f32
      %56 = vector.broadcast %cst_36 : f32 to vector<1x16xf32>
      %c0_37 = arith.constant 0 : index
      %c0_38 = arith.constant 0 : index
      %57 = vector.load %arg7[%c0_37, %c0_38] : memref<1x16xf32, #tpu.memory_space<vmem>>, vector<1x16xf32>
      tpu.vector_store %arg7[%c0_37, %c0_38], %56 {strides = array<i32>} : memref<1x16xf32, #tpu.memory_space<vmem>>, vector<1x16xf32>,
    } else {
    }
    %c0 = arith.constant 0 : index
    %c0_1 = arith.constant 0 : index
    %3 = vector.load %arg1[%c0, %c0_1] : memref<8x32xf32, #tpu.memory_space<vmem>>, vector<8x32xf32>
    %4 = arith.mulf %3, %3 : vector<8x32xf32>
    %cst = arith.constant dense<0.000000e+00> : vector<8xf32>
    %5 = vector.multi_reduction <add>, %4, %cst [1] : vector<8x32xf32> to vector<8xf32>
    %6 = vector.shape_cast %5 : vector<8xf32> to vector<8x1xf32>
    %7 = math.sqrt %6 : vector<8x1xf32>
    %cst_2 = arith.constant 9.99999996E-13 : f32
    %8 = vector.broadcast %cst_2 : f32 to vector<8x1xf32>
    %9 = arith.maximumf %7, %8 : vector<8x1xf32>
    %10 = vector.broadcast %9 : vector<8x1xf32> to vector<8x32xf32>
    %11 = arith.divf %3, %10 : vector<8x32xf32>
    %c0_3 = arith.constant 0 : index
    %c0_4 = arith.constant 0 : index
    %12 = vector.load %arg2[%c0_3, %c0_4] : memref<32x16xf32, #tpu.memory_space<vmem>>, vector<32x16xf32>
    %cst_5 = arith.constant dense<0.000000e+00> : vector<8x16xf32>
    %13 = tpu.matmul %11, %12, %cst_5 {dimension_numbers = #tpu.dot_dimension_numbers<[1], [0], [0], [1], [0, 0, 1, 1], [], []>} : vector<8x32xf32>, vector<32x16xf32>, vector<8x16xf32> -> vector<8x16xf32>
    %c0_6 = arith.constant 0 : index
    %c0_7 = arith.constant 0 : index
    %14 = vector.load %arg3[%c0_6, %c0_7] : memref<8x1xi32, #tpu.memory_space<vmem>>, vector<8x1xi32>
    %15 = tpu.iota {dimensions = array<i32: 1>} : vector<8x16xi32>
    %16 = vector.broadcast %14 : vector<8x1xi32> to vector<8x16xi32>
    %17 = arith.cmpi eq, %16, %15 : vector<8x16xi32>
    %cst_8 = arith.constant 1.000000e-01 : f32
    %18 = vector.broadcast %cst_8 : f32 to vector<8x16xf32>
    %19 = arith.subf %13, %18 : vector<8x16xf32>
    %cst_9 = arith.constant -3.200000e+01 : f32
    %20 = vector.broadcast %cst_9 : f32 to vector<8x16xf32>
    %21 = arith.mulf %20, %19 : vector<8x16xf32>
    %22 = math.exp %21 : vector<8x16xf32>
    %cst_10 = arith.constant 1.000000e-01 : f32
    %23 = vector.broadcast %cst_10 : f32 to vector<8x16xf32>
    %24 = arith.addf %13, %23 : vector<8x16xf32>
    %cst_11 = arith.constant 3.200000e+01 : f32
    %25 = vector.broadcast %cst_11 : f32 to vector<8x16xf32>
    %26 = arith.mulf %25, %24 : vector<8x16xf32>
    %27 = math.exp %26 : vector<8x16xf32>
    %c0_12 = arith.constant 0 : index
    %c0_13 = arith.constant 0 : index
    %28 = vector.load %arg5[%c0_12, %c0_13] : memref<1x16xf32, #tpu.memory_space<vmem>>, vector<1x16xf32>
    %cst_14 = arith.constant 0.000000e+00 : f32
    %29 = vector.broadcast %cst_14 : f32 to vector<8x16xf32>
    %30 = arith.select %17, %22, %29 : vector<8x16xi1>, vector<8x16xf32>
    %cst_15 = arith.constant dense<0.000000e+00> : vector<16xf32>
    %31 = vector.multi_reduction <add>, %30, %cst_15 [0] : vector<8x16xf32> to vector<16xf32>
    %32 = vector.shape_cast %31 : vector<16xf32> to vector<1x16xf32>
    %33 = arith.addf %28, %32 : vector<1x16xf32>
    %c0_16 = arith.constant 0 : index
    %c0_17 = arith.constant 0 : index
    %34 = vector.load %arg5[%c0_16, %c0_17] : memref<1x16xf32, #tpu.memory_space<vmem>>, vector<1x16xf32>
    tpu.vector_store %arg5[%c0_16, %c0_17], %33 {strides = array<i32>} : memref<1x16xf32, #tpu.memory_space<vmem>>, vector<1x16xf32>,
    %c0_18 = arith.constant 0 : index
    %c0_19 = arith.constant 0 : index
    %35 = vector.load %arg6[%c0_18, %c0_19] : memref<1x16xf32, #tpu.memory_space<vmem>>, vector<1x16xf32>
    %cst_20 = arith.constant 0.000000e+00 : f32
    %36 = vector.broadcast %cst_20 : f32 to vector<8x16xf32>
    %37 = arith.select %17, %36, %27 : vector<8x16xi1>, vector<8x16xf32>
    %cst_21 = arith.constant dense<0.000000e+00> : vector<16xf32>
    %38 = vector.multi_reduction <add>, %37, %cst_21 [0] : vector<8x16xf32> to vector<16xf32>
    %39 = vector.shape_cast %38 : vector<16xf32> to vector<1x16xf32>
    %40 = arith.addf %35, %39 : vector<1x16xf32>
    %c0_22 = arith.constant 0 : index
    %c0_23 = arith.constant 0 : index
    %41 = vector.load %arg6[%c0_22, %c0_23] : memref<1x16xf32, #tpu.memory_space<vmem>>, vector<1x16xf32>
    tpu.vector_store %arg6[%c0_22, %c0_23], %40 {strides = array<i32>} : memref<1x16xf32, #tpu.memory_space<vmem>>, vector<1x16xf32>,
    %c0_24 = arith.constant 0 : index
    %c0_25 = arith.constant 0 : index
    %42 = vector.load %arg7[%c0_24, %c0_25] : memref<1x16xf32, #tpu.memory_space<vmem>>, vector<1x16xf32>
    %43 = arith.extui %17 : vector<8x16xi1> to vector<8x16xi32>
    %44 = arith.sitofp %43 : vector<8x16xi32> to vector<8x16xf32>
    %cst_26 = arith.constant dense<0.000000e+00> : vector<16xf32>
    %45 = vector.multi_reduction <add>, %44, %cst_26 [0] : vector<8x16xf32> to vector<16xf32>
    %46 = vector.shape_cast %45 : vector<16xf32> to vector<1x16xf32>
    %47 = arith.addf %42, %46 : vector<1x16xf32>
    %c0_27 = arith.constant 0 : index
    %c0_28 = arith.constant 0 : index
    %48 = vector.load %arg7[%c0_27, %c0_28] : memref<1x16xf32, #tpu.memory_space<vmem>>, vector<1x16xf32>
    tpu.vector_store %arg7[%c0_27, %c0_28], %47 {strides = array<i32>} : memref<1x16xf32, #tpu.memory_space<vmem>>, vector<1x16xf32>,
    %c1_i32 = arith.constant 1 : i32
    %49 = arith.cmpi eq, %arg0, %c1_i32 : i32
    %50 = arith.extui %49 : i1 to i32
    %c0_i32_29 = arith.constant 0 : i32
    %51 = arith.cmpi ne, %50, %c0_i32_29 : i32
    scf.if %51 {
      %c0_30 = arith.constant 0 : index
      %c0_31 = arith.constant 0 : index
      %52 = vector.load %arg7[%c0_30, %c0_31] : memref<1x16xf32, #tpu.memory_space<vmem>>, vector<1x16xf32>
      %cst_32 = arith.constant 0.000000e+00 : f32
      %53 = vector.broadcast %cst_32 : f32 to vector<1x16xf32>
      %54 = arith.cmpf ogt, %52, %53 : vector<1x16xf32>
      %55 = arith.extui %54 : vector<1x16xi1> to vector<1x16xi32>
      %56 = arith.sitofp %55 : vector<1x16xi32> to vector<1x16xf32>
      %57 = vector.shape_cast %56 : vector<1x16xf32> to vector<1x1x16xf32>
      %cst_33 = arith.constant dense<0.000000e+00> : vector<1xf32>
      %58 = vector.multi_reduction <add>, %57, %cst_33 [1, 2] : vector<1x1x16xf32> to vector<1xf32>
      %59 = vector.shape_cast %58 : vector<1xf32> to vector<1x1x1xf32>
      %60 = vector.extract %59[0, 0, 0] : f32 from vector<1x1x1xf32>
      %c0_34 = arith.constant 0 : index
      %c0_35 = arith.constant 0 : index
      %61 = vector.load %arg5[%c0_34, %c0_35] : memref<1x16xf32, #tpu.memory_space<vmem>>, vector<1x16xf32>
      %cst_36 = arith.constant 1.000000e+00 : f32
      %62 = vector.broadcast %cst_36 : f32 to vector<1x16xf32>
      %63 = arith.addf %62, %61 : vector<1x16xf32>
      %64 = math.log %63 : vector<1x16xf32>
      %65 = vector.shape_cast %64 : vector<1x16xf32> to vector<1x1x16xf32>
      %cst_37 = arith.constant dense<0.000000e+00> : vector<1xf32>
      %66 = vector.multi_reduction <add>, %65, %cst_37 [1, 2] : vector<1x1x16xf32> to vector<1xf32>
      %67 = vector.shape_cast %66 : vector<1xf32> to vector<1x1x1xf32>
      %68 = vector.extract %67[0, 0, 0] : f32 from vector<1x1x1xf32>
      %69 = arith.divf %68, %60 : f32
      %c0_38 = arith.constant 0 : index
      %c0_39 = arith.constant 0 : index
      %70 = vector.load %arg6[%c0_38, %c0_39] : memref<1x16xf32, #tpu.memory_space<vmem>>, vector<1x16xf32>
      %cst_40 = arith.constant 1.000000e+00 : f32
      %71 = vector.broadcast %cst_40 : f32 to vector<1x16xf32>
      %72 = arith.addf %71, %70 : vector<1x16xf32>
      %73 = math.log %72 : vector<1x16xf32>
      %74 = vector.shape_cast %73 : vector<1x16xf32> to vector<1x1x16xf32>
      %cst_41 = arith.constant dense<0.000000e+00> : vector<1xf32>
      %75 = vector.multi_reduction <add>, %74, %cst_41 [1, 2] : vector<1x1x16xf32> to vector<1xf32>
      %76 = vector.shape_cast %75 : vector<1xf32> to vector<1x1x1xf32>
      %77 = vector.extract %76[0, 0, 0] : f32 from vector<1x1x1xf32>
      %cst_42 = arith.constant 1.600000e+01 : f32
      %78 = arith.divf %77, %cst_42 : f32
      %79 = arith.addf %69, %78 : f32
      %c0_43 = arith.constant 0 : index
      %80 = memref.load %arg4[%c0_43] : memref<1xf32, #tpu.memory_space<smem>>
      memref.store %79, %arg4[%c0_43] : memref<1xf32, #tpu.memory_space<smem>>
    } else {
    }
    return
  }
  func.func @transform_0(%arg0: i32) -> (i32, i32) {
    %c0_i32 = arith.constant 0 : i32
    %c0_i32_0 = arith.constant 0 : i32
    return %arg0, %c0_i32 : i32, i32
  }
  func.func @transform_1(%arg0: i32) -> (i32, i32) {
    %c0_i32 = arith.constant 0 : i32
    %c0_i32_0 = arith.constant 0 : i32
    %c0_i32_1 = arith.constant 0 : i32
    return %c0_i32, %c0_i32_0 : i32, i32
  }
  func.func @transform_2(%arg0: i32) -> (i32, i32) {
    %c0_i32 = arith.constant 0 : i32
    %c0_i32_0 = arith.constant 0 : i32
    return %arg0, %c0_i32 : i32, i32
  }
  func.func @transform_3(%arg0: i32) -> i32 {
    %c0_i32 = arith.constant 0 : i32
    %c0_i32_0 = arith.constant 0 : i32
    return %c0_i32 : i32
  }
}

</mosaic_0001>

<llo_original>
// kernel: tpu_custom_call.1
$region0: #{tpu_custom_call.1}
  #allocation0 [shape = 'u32[]', space=smem, size = 0x4, offset = 0x4, fixed_abs, tag = 'smem constant byte address 0x4 - core index']
  #allocation1 [shape = 'u32[72,128]{1,0:T(1,128)}', space=vmem, size = 0x9000, scoped, tag = 'internal scratch']
  #allocation2 [shape = 'f32[1,16]{1,0:T(1,128)}', space=vmem, size = 0x200, scoped, tag = 'scratch operand']
  #allocation3 [shape = 'f32[1,16]{1,0:T(1,128)}', space=vmem, size = 0x200, scoped, tag = 'scratch operand']
  #allocation4 [shape = 'f32[1,16]{1,0:T(1,128)}', space=vmem, size = 0x200, scoped, tag = 'scratch operand']
  %s0 = inlined_call_operand.vmem [shape: f32[16,32], index: 0, kind: input, shape index: {}]
  %s1 = inlined_call_operand.vmem [shape: f32[32,16], index: 1, kind: input, shape index: {}]
  %s2 = inlined_call_operand.vmem [shape: s32[16,1], index: 2, kind: input, shape index: {}]
  %s3 = inlined_call_operand.hbm [shape: f32[1], index: 3, kind: output, shape index: {}]
  %s4 = sld [smem:[#allocation0]]
  $region53: #{tpu_custom_call.1} parent=0
    _
  %s6 = ssub.s32 1, %s4
  %s7 = scalar_select 0, %s6, %s4
  $region1: #{tpu_custom_call.1} parent=0
    #allocation5 [shape = 'u8[512]{0}', space=smem, size = 0x200, scoped, tag = 'output window, operand 0, single buffered']
    #allocation6 [shape = 's32[2]{0}', space=sflag, size = 0x8, scoped, tag = 'scoped memory for tpu_custom_call.1']
    %8 = vsyncpa [#allocation6], 0
    loop: start=0, step=1, limit=4
    $region2: #{tpu_custom_call.1} parent=1 // loop_pre_header
      _
    $region3: #{tpu_custom_call.1} parent=1 // loop_header
      %s10 = sphi 0, %s14
      %p11 = scmp.ge.s32.totalorder %s10, 4
      %s20 = sphi 0, %s22
      %s23 = sphi 0, %s20
      %s24 = sphi 0, %s23
      %s40 = sphi 0, %s24
      %s44 = sphi 0, %s44
      %s46 = sphi 0, %s44
      %s47 = sphi 0, %s46
      %s61 = sphi 0, %s47
      %s67 = sphi 0, %s69
      %s70 = sphi 0, %s67
      %s71 = sphi 0, %s70
      %s87 = sphi 0, %s71
      %s91 = sphi 0, %s91
      %s93 = sphi 0, %s91
      %s94 = sphi 0, %s93
      %s108 = sphi 0, %s94
    $region4: #{tpu_custom_call.1} parent=1 // loop_header_branch
      %13 = sbr.rel (%p11) target = $region8
    $region5: #{tpu_custom_call.1} parent=1 // loop_body
      %s15 = ssub.s32 %s10, 1
      %s16 = ssub.s32 %s10, 2
      %s17 = sadd.s32 %s10, 1
      %s18 = ssub.s32 %s10, %s17
      %p19 = scmp.eq.s32.totalorder %s18, 0
      %s21 = sadd.s32 %s20, 1
      %s22 = scalar_select %p19, %s20, %s21
      %p25 = pneg %p19
      %p26 = scmp.eq.s32.totalorder %s10, 1
      %p27 = por %p25, %p26
      %p28 = scmp.ne.s32.totalorder %s20, %s23
      %p29 = scmp.eq.s32.totalorder %s10, 0
      %p30 = por %p28, %p29
      %p31 = scmp.ne.s32.totalorder %s20, %s23
      %p32 = scmp.eq.s32.totalorder %s15, 1
      %p33 = por %p31, %p32
      %p34 = scmp.ne.s32.totalorder %s23, %s24
      %p35 = scmp.eq.s32.totalorder %s15, 0
      %p36 = por %p34, %p35
      %p37 = scmp.ne.s32.totalorder %s23, %s24
      %p38 = scmp.eq.s32.totalorder %s16, 1
      %p39 = por %p37, %p38
      %p41 = scmp.ne.s32.totalorder %s24, %s40
      %p42 = scmp.eq.s32.totalorder %s16, 0
      %p43 = por %p41, %p42
      %s45 = sadd.s32 %s44, 1
      %p48 = scmp.eq.s32.totalorder %s10, 1
      %p49 = scmp.ne.s32.totalorder %s44, %s46
      %p50 = scmp.eq.s32.totalorder %s10, 0
      %p51 = por %p49, %p50
      %p52 = scmp.ne.s32.totalorder %s44, %s46
      %p53 = scmp.eq.s32.totalorder %s15, 1
      %p54 = por %p52, %p53
      %p55 = scmp.ne.s32.totalorder %s46, %s47
      %p56 = scmp.eq.s32.totalorder %s15, 0
      %p57 = por %p55, %p56
      %p58 = scmp.ne.s32.totalorder %s46, %s47
      %p59 = scmp.eq.s32.totalorder %s16, 1
      %p60 = por %p58, %p59
      %p62 = scmp.ne.s32.totalorder %s47, %s61
      %p63 = scmp.eq.s32.totalorder %s16, 0
      %p64 = por %p62, %p63
      %s65 = ssub.s32 %s10, %s17
      %p66 = scmp.eq.s32.totalorder %s65, 0
      %s68 = sadd.s32 %s67, 1
      %s69 = scalar_select %p66, %s67, %s68
      %p72 = pneg %p66
      %p73 = scmp.eq.s32.totalorder %s10, 1
      %p74 = por %p72, %p73
      %p75 = scmp.ne.s32.totalorder %s67, %s70
      %p76 = scmp.eq.s32.totalorder %s10, 0
      %p77 = por %p75, %p76
      %p78 = scmp.ne.s32.totalorder %s67, %s70
      %p79 = scmp.eq.s32.totalorder %s15, 1
      %p80 = por %p78, %p79
      %p81 = scmp.ne.s32.totalorder %s70, %s71
      %p82 = scmp.eq.s32.totalorder %s15, 0
      %p83 = por %p81, %p82
      %p84 = scmp.ne.s32.totalorder %s70, %s71
      %p85 = scmp.eq.s32.totalorder %s16, 1
      %p86 = por %p84, %p85
      %p88 = scmp.ne.s32.totalorder %s71, %s87
      %p89 = scmp.eq.s32.totalorder %s16, 0
      %p90 = por %p88, %p89
      %s92 = sadd.s32 %s91, 1
      %p95 = scmp.eq.s32.totalorder %s10, 1
      %p96 = scmp.ne.s32.totalorder %s91, %s93
      %p97 = scmp.eq.s32.totalorder %s10, 0
      %p98 = por %p96, %p97
      %p99 = scmp.ne.s32.totalorder %s91, %s93
      %p100 = scmp.eq.s32.totalorder %s15, 1
      %p101 = por %p99, %p100
      %p102 = scmp.ne.s32.totalorder %s93, %s94
      %p103 = scmp.eq.s32.totalorder %s15, 0
      %p104 = por %p102, %p103
      %p105 = scmp.ne.s32.totalorder %s93, %s94
      %p106 = scmp.eq.s32.totalorder %s16, 1
      %p107 = por %p105, %p106
      %p109 = scmp.ne.s32.totalorder %s94, %s108
      %p110 = scmp.eq.s32.totalorder %s16, 0
      %p111 = por %p109, %p110
      %p112 = scmp.le.s32.totalorder 1, %s10
      %p113 = scmp.lt.s32.totalorder %s10, 3
      %p114 = pnand %p112, %p113
      %p115 = pneg %p114
      // Predicated region
      $region9: #{tpu_custom_call.1} parent=5 // pred_check
        _
      $region10: #{tpu_custom_call.1} parent=5 // pred_check_branch
        %117 = sbr.rel (%p114) target = $region12
      $region11: #{tpu_custom_call.1} parent=5 // pred_region
        %s118 = ssub.s32 %s10, 1
        // Predicated region
        $region13: #{tpu_custom_call.1} parent=11 // pred_check
          %p119 = pneg %p57
        $region14: #{tpu_custom_call.1} parent=11 // pred_check_branch
          %121 = sbr.rel (%p119) target = $region16
        $region15: #{tpu_custom_call.1} parent=11 // pred_region
          _
        $region16: #{tpu_custom_call.1} parent=11 // pred_fallthru
          _
      $region12: #{tpu_custom_call.1} parent=5 // pred_fallthru
        _
      %p122 = scmp.lt.s32.totalorder %s10, 2
      // Predicated region
      $region17: #{tpu_custom_call.1} parent=5 // pred_check
        %p123 = pneg %p122
      $region18: #{tpu_custom_call.1} parent=5 // pred_check_branch
        %125 = sbr.rel (%p123) target = $region20
      $region19: #{tpu_custom_call.1} parent=5 // pred_region
        // Predicated region
        $region21: #{tpu_custom_call.1} parent=19 // pred_check
          %p126 = pneg %p30
        $region22: #{tpu_custom_call.1} parent=19 // pred_check_branch
          %128 = sbr.rel (%p126) target = $region24
        $region23: #{tpu_custom_call.1} parent=19 // pred_region
          %p129 = scmp.lt.s32.totalorder %s10, 1
          %s130 = scalar_select %p129, %s10, 1
          %s131 = smul.addr %s130, 8
          %s132 = scalar_lea.vmem %s0, %s131
        $region24: #{tpu_custom_call.1} parent=19 // pred_fallthru
          _
        // Predicated region
        $region25: #{tpu_custom_call.1} parent=19 // pred_check
          %p133 = pneg %p77
        $region26: #{tpu_custom_call.1} parent=19 // pred_check_branch
          %135 = sbr.rel (%p133) target = $region28
        $region27: #{tpu_custom_call.1} parent=19 // pred_region
          %p136 = scmp.lt.s32.totalorder %s10, 1
          %s137 = scalar_select %p136, %s10, 1
          %s138 = smul.addr %s137, 8
          %s139 = scalar_lea.vmem %s2, %s138
        $region28: #{tpu_custom_call.1} parent=19 // pred_fallthru
          _
      $region20: #{tpu_custom_call.1} parent=5 // pred_fallthru
        _
      %p140 = scmp.le.s32.totalorder 1, %s10
      %p141 = scmp.lt.s32.totalorder %s10, 3
      %p142 = pnand %p140, %p141
      %p143 = pneg %p142
      // Predicated region
      $region29: #{tpu_custom_call.1} parent=5 // pred_check
        _
      $region30: #{tpu_custom_call.1} parent=5 // pred_check_branch
        %145 = sbr.rel (%p142) target = $region32
      $region31: #{tpu_custom_call.1} parent=5 // pred_region
        %s146 = ssub.s32 %s10, 1
        %p147 = scmp.lt.s32.totalorder %s15, 1
        %s148 = scalar_select %p147, %s15, 1
        %s149 = smul.addr %s148, 8
        %s150 = scalar_lea.vmem %s0, %s149
        %p151 = pneg %p36
        %p152 = pneg %p33
        %p153 = pneg %p57
        %p154 = pneg %p54
        %p155 = scmp.lt.s32.totalorder %s15, 1
        %s156 = scalar_select %p155, %s15, 1
        %s157 = smul.addr %s156, 8
        %s158 = scalar_lea.vmem %s2, %s157
        %p159 = pneg %p83
        %p160 = pneg %p80
        %p161 = pneg %p104
        %p162 = pneg %p101
        %p163 = scmp.lt.s32.totalorder %s15, 1
        %s164 = scalar_select %p163, %s15, 1
        %s165 = smul.addr %s164, 8
        %s166 = scalar_lea.vmem %s0, %s165
        %p167 = scmp.lt.s32.totalorder %s15, 1
        %s168 = scalar_select %p167, %s15, 1
        %s169 = smul.addr %s168, 8
        %s170 = scalar_lea.vmem %s2, %s169
        %p171 = scmp.eq.s32.totalorder %s15, 0
        // Predicated region
        $region33: #{tpu_custom_call.1} parent=31 // pred_check
          %p172 = pneg %p171
        $region34: #{tpu_custom_call.1} parent=31 // pred_check_branch
          %174 = sbr.rel (%p172) target = $region36
        $region35: #{tpu_custom_call.1} parent=31 // pred_region
          %vm175 = vcmask 122880
          %176 = vst.msk [vmem:[#allocation2] sm:$0x1] %vm175, 0.0
          %177 = vst.msk [vmem:[#allocation3] sm:$0x1] %vm175, 0.0
          %178 = vst.msk [vmem:[#allocation4] sm:$0x1] %vm175, 0.0
        $region36: #{tpu_custom_call.1} parent=31 // pred_fallthru
          _
        %v179 = vld [vmem:[%s166] sm:$0xff]
        %v180 = vmul.f32 %v179, %v179
        %vm181 = vcmask 261120
        %v182 = vsel %vm181, %v180, 0.0
        %183 = vadd.xlane.f32.xlu0 %v182
        %v184 = vpop.xlane.xlu0 %183
        %v185 = vrsqrt.pop %v184
        %v186 = vmul.f32 %v185, %v184
        %v187 = vmul.f32 %v186, %v185
        %v188 = vmul.f32 0.5, %v187
        %v189 = vsub.f32 1.5, %v188
        %v190 = vmul.f32 %v185, %v189
        %v191 = vmul.f32 %v184, %v190
        %vm192 = vcmp.eq.f32.partialorder %v184, inf
        %v193 = vsel %vm192, %v184, %v191
        %vm194 = vcmp.eq.f32.partialorder %v184, 0.0
        %v195 = vand.u32 %v184, 2147483648
        %v196 = vsel %vm194, %v195, %v193
        %v197 = vmax.f32 %v196, 1e-12
        %v198 = vrcp.pop %v197
        %v199 = vmul.f32 %v197, %v198
        %v200 = vsub.f32 1.0, %v199
        %v201 = vmul.f32 %v198, %v200
        %v202 = vadd.f32 %v198, %v201
        %vm203 = vweird.f32 %v197
        %vm204 = vweird.f32 %v198
        %vm205 = vmor %vm203, %vm204
        %v206 = vsel %vm205, %v198, %v202
        %v207 = vand.u32 2147483647, %v197
        %vm208 = vcmp.eq.f32.partialorder %v207, 8.507059e+37
        %v209 = vand.u32 %v197, 2147483648
        %v210 = vor.u32 1.1754944e-38, %v209
        %v211 = vsel %vm208, %v210, %v206
        %v212 = vmul.f32 %v179, %v211
        %v213 = vld [vmem:[%s1] sm:$0xff]
        %v214 = vld [vmem:[%s1 + $0x8] sm:$0xff]
        %v215 = vld [vmem:[%s1 + $0x10] sm:$0xff]
        %v216 = vld [vmem:[%s1 + $0x18] sm:$0xff]
        %v218 = vsel %vm181, %v212, 0
        %220 = vmatpush.msra.mxu0 0.0
        %221 = vmatpush.msra.mxu0 0.0
        %222 = vmatpush.msra.mxu0 0.0
        %223 = vmatpush.msra.mxu0 0.0
        %224 = vmatpush.msra.mxu0 0.0
        %225 = vmatpush.msra.mxu0 0.0
        %226 = vmatpush.msra.mxu0 0.0
        %227 = vmatpush.msra.mxu0 0.0
        %228 = vmatpush.msra.mxu0 0.0
        %229 = vmatpush.msra.mxu0 0.0
        %230 = vmatpush.msra.mxu0 0.0
        %231 = vmatpush.msra.mxu0 0.0
        %232 = vmatpush.msra.mxu0 %v216
        %233 = vmatpush.msra.mxu0 %v215
        %234 = vmatpush.msra.mxu0 %v214
        %235 = vmatpush.msra.mxu0 %v213
        %236 = vmatmul.f32.gmra.mxu0 %v218
        %v237 = vpop.f32.mrf.mxu0
        %v238 = vadd.f32 0.0, %v237
        %239 = vdwg.mxu0
        %v240 = vld [vmem:[%s170] sm:$0xff]
        %v241 = vlaneseq
        %v242 = vand.u32 %v241, 127
        %243 = vset.pattern.permute.xlu0 0
        %244 = vperm.xlu0 %243, %v240
        %v245 = vpop.permute.xlu0 %244
        %vm246 = vcmp.eq.s32.totalorder %v245, %v242
        %v247 = vsub.f32 %v238, 0.1
        %v248 = vmul.f32 %v247, -32.0
        %v249 = vmul.f32 %v248, 1.442695
        %v250 = vpow.pop %v249
        %v251 = vadd.f32 %v238, 0.1
        %v252 = vmul.f32 %v251, 32.0
        %v253 = vmul.f32 %v252, 1.442695
        %v254 = vpow.pop %v253
        %v255 = vld [vmem:[#allocation2] sm:$0x1]
        %v256 = vsel %vm246, %v250, 0.0
        %vm257 = vcmask 130048
        %v258 = vsel %vm257, %v256, 0.0
        %v259 = vrot.slane %v258, 4
        %v260 = vadd.f32 %v258, %v259
        %v261 = vrot.slane %v260, 2
        %v262 = vadd.f32 %v260, %v261
        %v263 = vrot.slane %v262, 1
        %v264 = vadd.f32 %v262, %v263
        %v265 = vadd.f32 %v255, %v264
        %vm266 = vcmask 122880
        %267 = vst.msk [vmem:[#allocation2] sm:$0x1] %vm266, %v265
        %v268 = vld [vmem:[#allocation3] sm:$0x1]
        %v269 = vsel %vm246, 0.0, %v254
        %v270 = vsel %vm257, %v269, 0.0
        %v271 = vrot.slane %v270, 4
        %v272 = vadd.f32 %v270, %v271
        %v273 = vrot.slane %v272, 2
        %v274 = vadd.f32 %v272, %v273
        %v275 = vrot.slane %v274, 1
        %v276 = vadd.f32 %v274, %v275
        %v277 = vadd.f32 %v268, %v276
        %278 = vst.msk [vmem:[#allocation3] sm:$0x1] %vm266, %v277
        %v279 = vld [vmem:[#allocation4] sm:$0x1]
        %v280 = vsel %vm246, 1, 0
        %v281 = vcvt.s32.f32 %v280
        %v282 = vsel %vm257, %v281, 0.0
        %v283 = vrot.slane %v282, 4
        %v284 = vadd.f32 %v282, %v283
        %v285 = vrot.slane %v284, 2
        %v286 = vadd.f32 %v284, %v285
        %v287 = vrot.slane %v286, 1
        %v288 = vadd.f32 %v286, %v287
        %v289 = vadd.f32 %v279, %v288
        %290 = vst.msk [vmem:[#allocation4] sm:$0x1] %vm266, %v289
        %p291 = scmp.eq.s32.totalorder %s15, 1
        // Predicated region
        $region37: #{tpu_custom_call.1} parent=31 // pred_check
          %p292 = pneg %p291
        $region38: #{tpu_custom_call.1} parent=31 // pred_check_branch
          %294 = sbr.rel (%p292) target = $region40
        $region39: #{tpu_custom_call.1} parent=31 // pred_region
          %v295 = vld [vmem:[#allocation4] sm:$0x1]
          %vm296 = vcmp.gt.f32.partialorder %v295, 0.0
          %v297 = vsel %vm296, 1, 0
          %v298 = vcvt.s32.f32 %v297
          %v299 = vsel %vm266, %v298, 0.0
          %300 = vadd.xlane.f32.xlu0 %v299
          %v301 = vpop.xlane.xlu0 %300
          %v302 = vrot.slane %v301, 4
          %v303 = vadd.f32 %v301, %v302
          %v304 = vrot.slane %v303, 2
          %v305 = vadd.f32 %v303, %v304
          %v306 = vrot.slane %v305, 1
          %v307 = vadd.f32 %v305, %v306
          %s308 = vtos %v307
          %v309 = vld [vmem:[#allocation2] sm:$0x1]
          %v310 = vadd.f32 %v309, 1.0
          %v311 = vlog2.pop %v310
          %v312 = vmul.f32 %v311, 0.6931472
          %v313 = vsel %vm266, %v312, 0.0
          %314 = vadd.xlane.f32.xlu0 %v313
          %v315 = vpop.xlane.xlu0 %314
          %v316 = vrot.slane %v315, 4
          %v317 = vadd.f32 %v315, %v316
          %v318 = vrot.slane %v317, 2
          %v319 = vadd.f32 %v317, %v318
          %v320 = vrot.slane %v319, 1
          %v321 = vadd.f32 %v319, %v320
          %s322 = vtos %v321
          %v323 = vstv %s308
          %v324 = vrcp.pop %v323
          %v325 = vmul.f32 %v323, %v324
          %v326 = vsub.f32 1.0, %v325
          %v327 = vmul.f32 %v324, %v326
          %v328 = vadd.f32 %v324, %v327
          %vm329 = vweird.f32 %v323
          %vm330 = vweird.f32 %v324
          %vm331 = vmor %vm329, %vm330
          %v332 = vsel %vm331, %v324, %v328
          %v333 = vand.u32 2147483647, %v323
          %vm334 = vcmp.eq.f32.partialorder %v333, 8.507059e+37
          %v335 = vand.u32 %v323, 2147483648
          %v336 = vor.u32 1.1754944e-38, %v335
          %v337 = vsel %vm334, %v336, %v332
          %s338 = vtos %v337
          %s339 = smul.f32 %s322, %s338
          %v340 = vld [vmem:[#allocation3] sm:$0x1]
          %v341 = vadd.f32 %v340, 1.0
          %v342 = vlog2.pop %v341
          %v343 = vmul.f32 %v342, 0.6931472
          %v344 = vsel %vm266, %v343, 0.0
          %345 = vadd.xlane.f32.xlu0 %v344
          %v346 = vpop.xlane.xlu0 %345
          %v347 = vrot.slane %v346, 4
          %v348 = vadd.f32 %v346, %v347
          %v349 = vrot.slane %v348, 2
          %v350 = vadd.f32 %v348, %v349
          %v351 = vrot.slane %v350, 1
          %v352 = vadd.f32 %v350, %v351
          %s353 = vtos %v352
          %v354 = vrcp.pop 16.0
          %v355 = vmul.f32 16.0, %v354
          %v356 = vsub.f32 1.0, %v355
          %v357 = vmul.f32 %v354, %v356
          %v358 = vadd.f32 %v354, %v357
          %vm359 = vweird.f32 %v354
          %v360 = vsel %vm359, %v354, %v358
          %s361 = vtos %v360
          %s362 = smul.f32 %s353, %s361
          %s363 = sadd.f32 %s339, %s362
          %s364 = scalar_lea.smem [#allocation5], 0
          %365 = sst [smem:[%s364]] %s363
        $region40: #{tpu_custom_call.1} parent=31 // pred_fallthru
          _
        // Predicated region
        $region41: #{tpu_custom_call.1} parent=31 // pred_check
          %p366 = pneg %p101
        $region42: #{tpu_custom_call.1} parent=31 // pred_check_branch
          %368 = sbr.rel (%p366) target = $region44
        $region43: #{tpu_custom_call.1} parent=31 // pred_region
          %370 = vsyncadd [#allocation6], 0
          %s372 = sshll.u32 %s3, 4
          %s373 = int_to_ptr.hbm [resolvable:$true] %s372
          %375 = dma.smem_to_hbm [#allocation5], 16, %s373, [#allocation6]
        $region44: #{tpu_custom_call.1} parent=31 // pred_fallthru
          _
        // Predicated region
        $region45: #{tpu_custom_call.1} parent=31 // pred_check
          %p376 = pneg %p101
        $region46: #{tpu_custom_call.1} parent=31 // pred_check_branch
          %378 = sbr.rel (%p376) target = $region48
        $region47: #{tpu_custom_call.1} parent=31 // pred_region
          %380 = dma.done [#allocation6], 16
        $region48: #{tpu_custom_call.1} parent=31 // pred_fallthru
          _
        %381 = sfence
      $region32: #{tpu_custom_call.1} parent=5 // pred_fallthru
        _
      %p382 = scmp.le.s32.totalorder 2, %s10
      // Predicated region
      $region49: #{tpu_custom_call.1} parent=5 // pred_check
        %p383 = pneg %p382
      $region50: #{tpu_custom_call.1} parent=5 // pred_check_branch
        %385 = sbr.rel (%p383) target = $region52
      $region51: #{tpu_custom_call.1} parent=5 // pred_region
        %s386 = ssub.s32 %s10, 2
      $region52: #{tpu_custom_call.1} parent=5 // pred_fallthru
        _
    $region6: #{tpu_custom_call.1} parent=1 // loop_footer
      %s14 = sadd.s32 1, %s10
    $region7: #{tpu_custom_call.1} parent=1 // loop_footer_branch
      %9 = sbr.rel target = $region3
    $region8: #{tpu_custom_call.1} parent=1 // loop_exit
      _
    %387 = vsyncpa [#allocation6], 1
    %s388 = scalar_lea.sflag [#allocation6], 1
    %389 = vsyncpa %s388, 1

</llo_original>
